<compile_context>
chip_gen: v7x
topology: tpu7x:2x2x1
jax: 0.10.0
libtpu: 0.0.40
codegen_flags: <defaults>
</compile_context>

<pallas_src>
import functools

import jax
import jax.numpy as jnp
import numpy as np
from jax.experimental import pallas as pl
from jax.experimental.pallas import tpu as pltpu


_LANE_TILE = 128                         # column tile == MXU contraction depth
_VMEM_TILE_BUDGET = 20 * 1024 * 1024     # per-step pipelined-buffer budget (v7x-safe)


def _round_up(x, m):
    return ((x + m - 1) // m) * m


def _tile_vmem_bytes(rt, ct, B, out_bytes):
    # double-buffered input (f32) + double-buffered output + E (bf16, conservatively x2)
    return 2 * rt * ct * 4 + 2 * rt * ct * B * out_bytes + 2 * ct * ct * B * 2


def _quantization_kernel(x_ref, e_ref, o_ref, *, B):
    step = float(2 ** B)
    x = x_ref[...].astype(jnp.float32)                       # (Rt, 128)
    q = jnp.round(x * step - 0.5)                            # round-half-even, like torch.round
    # Emulate .type(torch.uint8) wrap; result is an integer in [0, 255] -> exact in bf16.
    q = (q.astype(jnp.int32) & 0xFF).astype(jnp.bfloat16)
    # (Rt, 128) @ (128, 128*B): column j*B+k of E holds 2^-(B-1-k) at row j (else 0), so
    # scaled[:, j*B+k] == q[:, j] / 2^(B-1-k)  -- exact: one nonzero term, power-of-two
    # scale, f32 accumulation on the MXU.
    scaled = jnp.dot(q, e_ref[...], preferred_element_type=jnp.float32)
    bits = scaled.astype(jnp.int32) & 1                      # (q >> (B-1-k)) & 1
    o_ref[...] = bits.astype(o_ref.dtype)


def quantization_layer(x, B, out_dtype=jnp.float32):
    """Pallas TPU forward of QuantizationLayer: x (b, n) -> (b, n*B).

    out_dtype=float32 matches the PyTorch module exactly; pass bf16/int8 to shrink the
    (B-x amplified, store-bound) output traffic if downstream allows it.
    """
    b, n = x.shape
    Ct = _LANE_TILE
    out_bytes = jnp.dtype(out_dtype).itemsize

    # --- tile selection (VMEM-aware, sublane/lane aligned) --------------------------
    b_pad = _round_up(b, 8)
    n_pad = _round_up(n, Ct)

    Rt = 8
    for cand in (1024, 512, 256, 128, 64, 32, 16, 8):
        if cand <= b_pad and _tile_vmem_bytes(cand, Ct, B, out_bytes) <= _VMEM_TILE_BUDGET:
            Rt = cand
            break
    b_pad = _round_up(b_pad, Rt)

    # Keep >= 2 grid steps when possible so both v7x TensorCores get work.
    if (b_pad // Rt) * (n_pad // Ct) < 2 and Rt >= 16:
        Rt //= 2

    grid = (b_pad // Rt, n_pad // Ct)

    # --- zero-pad to aligned tiles (padded rows/cols quantize to zero bits) ---------
    if (b_pad, n_pad) != (b, n):
        x = jnp.pad(x, ((0, b_pad - b), (0, n_pad - n)))

    # --- shared block-diagonal expansion matrix (128, 128*B), bf16 ------------------
    jj = np.arange(Ct)[:, None]
    cc = np.arange(Ct * B)[None, :]
    E = np.where(cc // B == jj, 2.0 ** (-(B - 1 - (cc % B))), 0.0).astype(np.float32)
    E = jnp.asarray(E, dtype=jnp.bfloat16)   # powers of two -> exact in bf16

    # Derived VMEM limit: 2x headroom over the pipelined tiles, never above the
    # v7x scoped default (32 MiB of its 64 MiB/TC).
    vmem_need = _tile_vmem_bytes(Rt, Ct, B, out_bytes)
    vmem_limit = int(min(32 * 1024 * 1024, max(2 * vmem_need, 8 * 1024 * 1024)))

    kernel = functools.partial(_quantization_kernel, B=B)
    out_padded = pl.pallas_call(
        kernel,
        out_shape=jax.ShapeDtypeStruct((b_pad, n_pad * B), out_dtype),
        grid_spec=pltpu.PrefetchScalarGridSpec(
            num_scalar_prefetch=0,
            grid=grid,
            in_specs=[
                pl.BlockSpec((Rt, Ct), lambda i, j: (i, j)),
                # Constant index_map -> fetched once and VMEM-resident (only 32*B KiB,
                # so double-buffering it is negligible; no need for Buffered(1)).
                pl.BlockSpec((Ct, Ct * B), lambda i, j: (0, 0)),
            ],
            out_specs=pl.BlockSpec((Rt, Ct * B), lambda i, j: (i, j)),
        ),
        compiler_params=pltpu.CompilerParams(
            dimension_semantics=("parallel", "parallel"),
            vmem_limit_bytes=vmem_limit,
        ),
    )(x, E)

    if (b_pad, n_pad) != (b, n):
        out_padded = out_padded[:b, : n * B]
    return out_padded


def quantization_ref(x, B):
    # pure-JAX reference matching the PyTorch Quantization.forward / Num2Bit
    step = 2 ** B
    q = jnp.round(x * step - 0.5).astype(jnp.int32) & 0xFF
    shifts = jnp.arange(B - 1, -1, -1, dtype=jnp.int32)
    bits = (q[:, :, None] >> shifts[None, None, :]) & 1
    return bits.reshape(x.shape[0], -1).astype(jnp.float32)


if __name__ == "__main__":
    key = jax.random.PRNGKey(0)
    k1, k2 = jax.random.split(key)

    # (1) aligned demo shape; typical input domain of this layer (post-sigmoid) is [0, 1).
    Bq = 4
    batch, n = 16, 128
    x = jax.random.uniform(k1, (batch, n), jnp.float32)
    out = jax.block_until_ready(quantization_layer(x, Bq))
    ref = quantization_ref(x, Bq)
    np.testing.assert_array_equal(np.asarray(out), np.asarray(ref))
    assert out.shape == (batch, n * Bq)

    # (2) unaligned shape exercising the pad-and-slice path.
    Bq2 = 3
    x2 = jax.random.uniform(k2, (10, 200), jnp.float32)
    out2 = jax.block_until_ready(quantization_layer(x2, Bq2))
    ref2 = quantization_ref(x2, Bq2)
    np.testing.assert_array_equal(np.asarray(out2), np.asarray(ref2))
    assert out2.shape == (10, 200 * Bq2)

    # TODO(synk): backward (straight-through averaged gradient) is autograd-only in the
    # PyTorch module and is not part of this forward kernel.
    print("KERNEL_OK")
</pallas_src>

<mosaic_0001>
module attributes {stable_mosaic.version = 11 : i64} {
  func.func @_quantization_kernel(%arg0: i32, %arg1: i32, %arg2: memref<8x128xf32, #tpu.memory_space<vmem>>, %arg3: memref<128x512xbf16, #tpu.memory_space<vmem>>, %arg4: memref<8x512xf32, #tpu.memory_space<vmem>>) attributes {dimension_semantics = [#tpu.dimension_semantics<parallel>, #tpu.dimension_semantics<parallel>], iteration_bounds = array<i64: 2, 1>, scalar_prefetch = 0 : i64, scratch_operands = 0 : i64, tpu.core_type = #tpu.core_type<tc>, window_params = [{transform_indices = @transform_0, window_bounds = array<i64: 8, 128>}, {pipeline_mode = #tpu.pipeline_mode<synchronous>, transform_indices = @transform_1, window_bounds = array<i64: 128, 512>}, {transform_indices = @transform_2, window_bounds = array<i64: 8, 512>}]} {
    %c0 = arith.constant 0 : index
    %c0_0 = arith.constant 0 : index
    %0 = vector.load %arg2[%c0, %c0_0] : memref<8x128xf32, #tpu.memory_space<vmem>>, vector<8x128xf32>
    %cst = arith.constant 1.600000e+01 : f32
    %1 = vector.broadcast %cst : f32 to vector<8x128xf32>
    %2 = arith.mulf %0, %1 : vector<8x128xf32>
    %cst_1 = arith.constant 5.000000e-01 : f32
    %3 = vector.broadcast %cst_1 : f32 to vector<8x128xf32>
    %4 = arith.subf %2, %3 : vector<8x128xf32>
    %5 = math.roundeven %4 : vector<8x128xf32>
    %6 = arith.fptosi %5 : vector<8x128xf32> to vector<8x128xi32>
    %c255_i32 = arith.constant 255 : i32
    %7 = vector.broadcast %c255_i32 : i32 to vector<8x128xi32>
    %8 = arith.andi %6, %7 : vector<8x128xi32>
    %9 = arith.sitofp %8 : vector<8x128xi32> to vector<8x128xbf16>
    %c0_2 = arith.constant 0 : index
    %c0_3 = arith.constant 0 : index
    %10 = vector.load %arg3[%c0_2, %c0_3] : memref<128x512xbf16, #tpu.memory_space<vmem>>, vector<128x512xbf16>
    %cst_4 = arith.constant dense<0.000000e+00> : vector<8x512xf32>
    %11 = tpu.matmul %9, %10, %cst_4 {dimension_numbers = #tpu.dot_dimension_numbers<[1], [0], [0], [1], [0, 0, 1, 1], [], []>} : vector<8x128xbf16>, vector<128x512xbf16>, vector<8x512xf32> -> vector<8x512xf32>
    %12 = arith.fptosi %11 : vector<8x512xf32> to vector<8x512xi32>
    %c1_i32 = arith.constant 1 : i32
    %13 = vector.broadcast %c1_i32 : i32 to vector<8x512xi32>
    %14 = arith.andi %12, %13 : vector<8x512xi32>
    %15 = arith.sitofp %14 : vector<8x512xi32> to vector<8x512xf32>
    %c0_5 = arith.constant 0 : index
    %c0_6 = arith.constant 0 : index
    %16 = vector.load %arg4[%c0_5, %c0_6] : memref<8x512xf32, #tpu.memory_space<vmem>>, vector<8x512xf32>
    tpu.vector_store %arg4[%c0_5, %c0_6], %15 {strides = array<i32>} : memref<8x512xf32, #tpu.memory_space<vmem>>, vector<8x512xf32>,
    return
  }
  func.func @transform_0(%arg0: i32, %arg1: i32) -> (i32, i32) {
    %c0_i32 = arith.constant 0 : i32
    return %arg0, %arg1 : i32, i32
  }
  func.func @transform_1(%arg0: i32, %arg1: i32) -> (i32, i32) {
    %c0_i32 = arith.constant 0 : i32
    %c0_i32_0 = arith.constant 0 : i32
    %c0_i32_1 = arith.constant 0 : i32
    return %c0_i32, %c0_i32_0 : i32, i32
  }
  func.func @transform_2(%arg0: i32, %arg1: i32) -> (i32, i32) {
    %c0_i32 = arith.constant 0 : i32
    return %arg0, %arg1 : i32, i32
  }
}

</mosaic_0001>

<llo_original>
// kernel: tpu_custom_call.1
$region0: #{tpu_custom_call.1}
  #allocation0 [shape = 'u32[]', space=smem, size = 0x4, offset = 0x4, fixed_abs, tag = 'smem constant byte address 0x4 - core index']
  #allocation1 [shape = 'u32[144,128]{1,0:T(1,128)}', space=vmem, size = 0x12000, scoped, tag = 'internal scratch']
  %s0 = inlined_call_operand.hbm [shape: f32[16,128], index: 0, kind: input, shape index: {}]
  %s1 = inlined_call_operand.hbm [shape: bf16[128,512], index: 1, kind: input, shape index: {}]
  %s2 = inlined_call_operand.hbm [shape: f32[16,512], index: 2, kind: output, shape index: {}]
  %s3 = sld [smem:[#allocation0]]
  $region49: #{tpu_custom_call.1} parent=0
    _
  %s5 = ssub.s32 1, %s3
  %s6 = scalar_select 0, %s5, %s3
  $region1: #{tpu_custom_call.1} parent=0
    #allocation2 [shape = 'u8[8192]{0}', space=vmem, size = 0x2000, scoped, tag = 'input window, operand 0']
    #allocation3 [shape = 's32[2]{0}', space=sflag, size = 0x8, scoped, tag = 'scoped memory for tpu_custom_call.1']
    #allocation4 [shape = 's32[2]{0}', space=sflag, size = 0x8, scoped, tag = 'scoped memory for tpu_custom_call.1']
    #allocation5 [shape = 'u8[131072]{0}', space=vmem, size = 0x20000, scoped, tag = 'input window, operand 1, single buffered']
    #allocation6 [shape = 's32[1]{0}', space=sflag, size = 0x4, scoped, tag = 'scoped memory for tpu_custom_call.1']
    #allocation7 [shape = 'u8[32768]{0}', space=vmem, size = 0x8000, scoped, tag = 'output window, operand 0']
    %7 = vsyncpa [#allocation3], 0
    %s8 = scalar_lea.sflag [#allocation3], 1
    %9 = vsyncpa %s8, 0
    %10 = vsyncpa [#allocation6], 0
    %11 = vsyncpa [#allocation4], 0
    %s12 = scalar_lea.sflag [#allocation4], 1
    %13 = vsyncpa %s12, 0
    loop: start=0, step=1, limit=4
    $region2: #{tpu_custom_call.1} parent=1 // loop_pre_header
      _
    $region3: #{tpu_custom_call.1} parent=1 // loop_header
      %s15 = sphi 0, %s19
      %p16 = scmp.ge.s32.totalorder %s15, 4
      %s22 = sphi 0, %s34
      %s23 = sphi 0, %s30
      %s24 = sphi 0, %s22
      %s25 = sphi 0, %s23
      %s26 = sphi 0, %s24
      %s27 = sphi 0, %s25
      %s39 = sphi 0, %s41
      %s42 = sphi 0, %s39
      %s43 = sphi 0, %s42
      %s59 = sphi 0, %s43
      %s63 = sphi 0, %s63
      %s65 = sphi 0, %s63
      %s66 = sphi 0, %s65
      %s80 = sphi 0, %s66
      %s88 = sphi 0, %s90
      %s91 = sphi 0, %s88
      %s92 = sphi 0, %s91
      %s108 = sphi 0, %s92
    $region4: #{tpu_custom_call.1} parent=1 // loop_header_branch
      %18 = sbr.rel (%p16) target = $region8
    $region5: #{tpu_custom_call.1} parent=1 // loop_body
      %s20 = ssub.s32 %s15, 1
      %s21 = ssub.s32 %s15, 2
      %s28 = sadd.s32 1, %s23
      %p29 = scmp.ge.s32.totalorder %s28, 1
      %s30 = scalar_select %p29, 0, %s28
      %s31 = sadd.s32 1, %s22
      %s32 = scalar_select %p29, %s31, %s22
      %p33 = scmp.ge.s32.totalorder %s32, 2
      %s34 = scalar_select %p33, 0, %s32
      %s35 = ssub.s32 %s22, %s34
      %s36 = ssub.s32 %s23, %s30
      %s37 = sor.u32 %s35, %s36
      %p38 = scmp.eq.s32.totalorder %s37, 0
      %s40 = sadd.s32 %s39, 1
      %s41 = scalar_select %p38, %s39, %s40
      %p44 = pneg %p38
      %p45 = scmp.eq.s32.totalorder %s15, 1
      %p46 = por %p44, %p45
      %p47 = scmp.ne.s32.totalorder %s39, %s42
      %p48 = scmp.eq.s32.totalorder %s15, 0
      %p49 = por %p47, %p48
      %p50 = scmp.ne.s32.totalorder %s39, %s42
      %p51 = scmp.eq.s32.totalorder %s20, 1
      %p52 = por %p50, %p51
      %p53 = scmp.ne.s32.totalorder %s42, %s43
      %p54 = scmp.eq.s32.totalorder %s20, 0
      %p55 = por %p53, %p54
      %p56 = scmp.ne.s32.totalorder %s42, %s43
      %p57 = scmp.eq.s32.totalorder %s21, 1
      %p58 = por %p56, %p57
      %p60 = scmp.ne.s32.totalorder %s43, %s59
      %p61 = scmp.eq.s32.totalorder %s21, 0
      %p62 = por %p60, %p61
      %s64 = sadd.s32 %s63, 1
      %p67 = scmp.eq.s32.totalorder %s15, 1
      %p68 = scmp.ne.s32.totalorder %s63, %s65
      %p69 = scmp.eq.s32.totalorder %s15, 0
      %p70 = por %p68, %p69
      %p71 = scmp.ne.s32.totalorder %s63, %s65
      %p72 = scmp.eq.s32.totalorder %s20, 1
      %p73 = por %p71, %p72
      %p74 = scmp.ne.s32.totalorder %s65, %s66
      %p75 = scmp.eq.s32.totalorder %s20, 0
      %p76 = por %p74, %p75
      %p77 = scmp.ne.s32.totalorder %s65, %s66
      %p78 = scmp.eq.s32.totalorder %s21, 1
      %p79 = por %p77, %p78
      %p81 = scmp.ne.s32.totalorder %s66, %s80
      %p82 = scmp.eq.s32.totalorder %s21, 0
      %p83 = por %p81, %p82
      %s84 = ssub.s32 %s22, %s34
      %s85 = ssub.s32 %s23, %s30
      %s86 = sor.u32 %s84, %s85
      %p87 = scmp.eq.s32.totalorder %s86, 0
      %s89 = sadd.s32 %s88, 1
      %s90 = scalar_select %p87, %s88, %s89
      %p93 = pneg %p87
      %p94 = scmp.eq.s32.totalorder %s15, 1
      %p95 = por %p93, %p94
      %p96 = scmp.ne.s32.totalorder %s88, %s91
      %p97 = scmp.eq.s32.totalorder %s15, 0
      %p98 = por %p96, %p97
      %p99 = scmp.ne.s32.totalorder %s88, %s91
      %p100 = scmp.eq.s32.totalorder %s20, 1
      %p101 = por %p99, %p100
      %p102 = scmp.ne.s32.totalorder %s91, %s92
      %p103 = scmp.eq.s32.totalorder %s20, 0
      %p104 = por %p102, %p103
      %p105 = scmp.ne.s32.totalorder %s91, %s92
      %p106 = scmp.eq.s32.totalorder %s21, 1
      %p107 = por %p105, %p106
      %p109 = scmp.ne.s32.totalorder %s92, %s108
      %p110 = scmp.eq.s32.totalorder %s21, 0
      %p111 = por %p109, %p110
      %p112 = scmp.le.s32.totalorder 1, %s15
      %p113 = scmp.lt.s32.totalorder %s15, 3
      %p114 = pnand %p112, %p113
      %p115 = pneg %p114
      // Predicated region
      $region9: #{tpu_custom_call.1} parent=5 // pred_check
        _
      $region10: #{tpu_custom_call.1} parent=5 // pred_check_branch
        %117 = sbr.rel (%p114) target = $region12
      $region11: #{tpu_custom_call.1} parent=5 // pred_region
        %s118 = ssub.s32 %s15, 1
        // Predicated region
        $region13: #{tpu_custom_call.1} parent=11 // pred_check
          %p119 = pneg %p76
        $region14: #{tpu_custom_call.1} parent=11 // pred_check_branch
          %121 = sbr.rel (%p119) target = $region16
        $region15: #{tpu_custom_call.1} parent=11 // pred_region
          %s123 = ssub.s32 4096, 4096
          %124 = vsyncadd [#allocation6], %s123
          %s125 = sshll.u32 [#allocation5], 4
          %s126 = int_to_ptr.vmem [resolvable:$true] %s125
          %131 = dma.hbm_to_vmem [thread:$0]  %s1, 4096, %s126, [#allocation6], 256, 256, 16
        $region16: #{tpu_custom_call.1} parent=11 // pred_fallthru
          _
      $region12: #{tpu_custom_call.1} parent=5 // pred_fallthru
        _
      %p132 = scmp.lt.s32.totalorder %s15, 2
      // Predicated region
      $region17: #{tpu_custom_call.1} parent=5 // pred_check
        %p133 = pneg %p132
      $region18: #{tpu_custom_call.1} parent=5 // pred_check_branch
        %135 = sbr.rel (%p133) target = $region20
      $region19: #{tpu_custom_call.1} parent=5 // pred_region
        // Predicated region
        $region21: #{tpu_custom_call.1} parent=19 // pred_check
          %p136 = pneg %p49
        $region22: #{tpu_custom_call.1} parent=19 // pred_check_branch
          %138 = sbr.rel (%p136) target = $region24
        $region23: #{tpu_custom_call.1} parent=19 // pred_region
          %s139 = sand.u32 %s39, 1
          %s140 = scalar_lea.sflag [#allocation3], %s139
          %s141 = sand.u32 %s39, 1
          %s142 = smul.addr %s141, 8
          %s143 = scalar_lea.vmem [#allocation2], %s142
          %s145 = ssub.s32 128, 128
          %146 = vsyncadd %s140, %s145
          %s147 = sadd.s32 %s23, %s22
          %s148 = smul.addr %s147, 128
          %s149 = scalar_lea.hbm %s0, %s148
          %s151 = sshll.u32 %s143, 4
          %s152 = int_to_ptr.vmem [resolvable:$true] %s151
          %154 = dma.hbm_to_vmem [thread:$0]  %s149, 128, %s152, %s140
        $region24: #{tpu_custom_call.1} parent=19 // pred_fallthru
          _
      $region20: #{tpu_custom_call.1} parent=5 // pred_fallthru
        _
      %p155 = scmp.le.s32.totalorder 1, %s15
      %p156 = scmp.lt.s32.totalorder %s15, 3
      %p157 = pnand %p155, %p156
      %p158 = pneg %p157
      // Predicated region
      $region25: #{tpu_custom_call.1} parent=5 // pred_check
        _
      $region26: #{tpu_custom_call.1} parent=5 // pred_check_branch
        %160 = sbr.rel (%p157) target = $region28
      $region27: #{tpu_custom_call.1} parent=5 // pred_region
        %s161 = ssub.s32 %s15, 1
        %s162 = sand.u32 %s42, 1
        %s163 = scalar_lea.sflag [#allocation3], %s162
        %s164 = sand.u32 %s42, 1
        %s165 = smul.addr %s164, 8
        %s166 = scalar_lea.vmem [#allocation2], %s165
        // Predicated region
        $region29: #{tpu_custom_call.1} parent=27 // pred_check
          %p167 = pneg %p55
        $region30: #{tpu_custom_call.1} parent=27 // pred_check_branch
          %169 = sbr.rel (%p167) target = $region32
        $region31: #{tpu_custom_call.1} parent=27 // pred_region
          %170 = dma.done %s163, 128
        $region32: #{tpu_custom_call.1} parent=27 // pred_fallthru
          _
        // Predicated region
        $region33: #{tpu_custom_call.1} parent=27 // pred_check
          %p171 = pneg %p76
        $region34: #{tpu_custom_call.1} parent=27 // pred_check_branch
          %173 = sbr.rel (%p171) target = $region36
        $region35: #{tpu_custom_call.1} parent=27 // pred_region
          %174 = dma.done [#allocation6], 4096
        $region36: #{tpu_custom_call.1} parent=27 // pred_fallthru
          _
        %s175 = sand.u32 %s42, 1
        %s176 = scalar_lea.sflag [#allocation3], %s175
        %s177 = sand.u32 %s42, 1
        %s178 = smul.addr %s177, 8
        %s179 = scalar_lea.vmem [#allocation2], %s178
        %p180 = pneg %p55
        %p181 = pneg %p52
        %p182 = pneg %p76
        %p183 = pneg %p73
        %p184 = pneg %p104
        %p185 = pneg %p101
        %s186 = sand.u32 %s91, 1
        %s187 = scalar_lea.sflag [#allocation4], %s186
        %s188 = sand.u32 %s91, 1
        %s189 = smul.addr %s188, 32
        %s190 = scalar_lea.vmem [#allocation7], %s189
        %s191 = smul.u32 4, %s25
        %v193 = vld [vmem:[%s166] sm:$0xff]
        %v194 = vmul.f32 %v193, 16.0
        %v195 = vsub.f32 %v194, 0.5
        %v196 = vcvt.f32.s32.ties.to.even %v195
        %v197 = vand.u32 %v196, 255
        %v198 = vcvt.s32.f32 %v197
        %v199 = vpack.c.bf16 %v198, %v198
        %v200 = vld [vmem:[#allocation5] sm:$0xff]
        %v201 = vld [vmem:[#allocation5 + $0x8] sm:$0xff]
        %v202 = vld [vmem:[#allocation5 + $0x10] sm:$0xff]
        %v203 = vld [vmem:[#allocation5 + $0x18] sm:$0xff]
        %v204 = vld [vmem:[#allocation5 + $0x20] sm:$0xff]
        %v205 = vld [vmem:[#allocation5 + $0x28] sm:$0xff]
        %v206 = vld [vmem:[#allocation5 + $0x30] sm:$0xff]
        %v207 = vld [vmem:[#allocation5 + $0x38] sm:$0xff]
        %v208 = vld [vmem:[#allocation5 + $0x40] sm:$0xff]
        %v209 = vld [vmem:[#allocation5 + $0x48] sm:$0xff]
        %v210 = vld [vmem:[#allocation5 + $0x50] sm:$0xff]
        %v211 = vld [vmem:[#allocation5 + $0x58] sm:$0xff]
        %v212 = vld [vmem:[#allocation5 + $0x60] sm:$0xff]
        %v213 = vld [vmem:[#allocation5 + $0x68] sm:$0xff]
        %v214 = vld [vmem:[#allocation5 + $0x70] sm:$0xff]
        %v215 = vld [vmem:[#allocation5 + $0x78] sm:$0xff]
        %v216 = vld [vmem:[#allocation5 + $0x80] sm:$0xff]
        %v217 = vld [vmem:[#allocation5 + $0x88] sm:$0xff]
        %v218 = vld [vmem:[#allocation5 + $0x90] sm:$0xff]
        %v219 = vld [vmem:[#allocation5 + $0x98] sm:$0xff]
        %v220 = vld [vmem:[#allocation5 + $0xa0] sm:$0xff]
        %v221 = vld [vmem:[#allocation5 + $0xa8] sm:$0xff]
        %v222 = vld [vmem:[#allocation5 + $0xb0] sm:$0xff]
        %v223 = vld [vmem:[#allocation5 + $0xb8] sm:$0xff]
        %v224 = vld [vmem:[#allocation5 + $0xc0] sm:$0xff]
        %v225 = vld [vmem:[#allocation5 + $0xc8] sm:$0xff]
        %v226 = vld [vmem:[#allocation5 + $0xd0] sm:$0xff]
        %v227 = vld [vmem:[#allocation5 + $0xd8] sm:$0xff]
        %v228 = vld [vmem:[#allocation5 + $0xe0] sm:$0xff]
        %v229 = vld [vmem:[#allocation5 + $0xe8] sm:$0xff]
        %v230 = vld [vmem:[#allocation5 + $0xf0] sm:$0xff]
        %v231 = vld [vmem:[#allocation5 + $0xf8] sm:$0xff]
        %v264 = vunpack.c.l.b16 %v200
        %v265 = vunpack.c.h.b16 %v200
        %v266 = vunpack.c.l.b16 %v201
        %v267 = vunpack.c.h.b16 %v201
        %v268 = vunpack.c.l.b16 %v202
        %v269 = vunpack.c.h.b16 %v202
        %v270 = vunpack.c.l.b16 %v203
        %v271 = vunpack.c.h.b16 %v203
        %v272 = vunpack.c.l.b16 %v204
        %v273 = vunpack.c.h.b16 %v204
        %v274 = vunpack.c.l.b16 %v205
        %v275 = vunpack.c.h.b16 %v205
        %v276 = vunpack.c.l.b16 %v206
        %v277 = vunpack.c.h.b16 %v206
        %v278 = vunpack.c.l.b16 %v207
        %v279 = vunpack.c.h.b16 %v207
        %v280 = vunpack.c.l.b16 %v208
        %v281 = vunpack.c.h.b16 %v208
        %v282 = vunpack.c.l.b16 %v209
        %v283 = vunpack.c.h.b16 %v209
        %v284 = vunpack.c.l.b16 %v210
        %v285 = vunpack.c.h.b16 %v210
        %v286 = vunpack.c.l.b16 %v211
        %v287 = vunpack.c.h.b16 %v211
        %v288 = vunpack.c.l.b16 %v212
        %v289 = vunpack.c.h.b16 %v212
        %v290 = vunpack.c.l.b16 %v213
        %v291 = vunpack.c.h.b16 %v213
        %v292 = vunpack.c.l.b16 %v214
        %v293 = vunpack.c.h.b16 %v214
        %v294 = vunpack.c.l.b16 %v215
        %v295 = vunpack.c.h.b16 %v215
        %v296 = vunpack.c.l.b16 %v216
        %v297 = vunpack.c.h.b16 %v216
        %v298 = vunpack.c.l.b16 %v217
        %v299 = vunpack.c.h.b16 %v217
        %v300 = vunpack.c.l.b16 %v218
        %v301 = vunpack.c.h.b16 %v218
        %v302 = vunpack.c.l.b16 %v219
        %v303 = vunpack.c.h.b16 %v219
        %v304 = vunpack.c.l.b16 %v220
        %v305 = vunpack.c.h.b16 %v220
        %v306 = vunpack.c.l.b16 %v221
        %v307 = vunpack.c.h.b16 %v221
        %v308 = vunpack.c.l.b16 %v222
        %v309 = vunpack.c.h.b16 %v222
        %v310 = vunpack.c.l.b16 %v223
        %v311 = vunpack.c.h.b16 %v223
        %v312 = vunpack.c.l.b16 %v224
        %v313 = vunpack.c.h.b16 %v224
        %v314 = vunpack.c.l.b16 %v225
        %v315 = vunpack.c.h.b16 %v225
        %v316 = vunpack.c.l.b16 %v226
        %v317 = vunpack.c.h.b16 %v226
        %v318 = vunpack.c.l.b16 %v227
        %v319 = vunpack.c.h.b16 %v227
        %v320 = vunpack.c.l.b16 %v228
        %v321 = vunpack.c.h.b16 %v228
        %v322 = vunpack.c.l.b16 %v229
        %v323 = vunpack.c.h.b16 %v229
        %v324 = vunpack.c.l.b16 %v230
        %v325 = vunpack.c.h.b16 %v230
        %v326 = vunpack.c.l.b16 %v231
        %v327 = vunpack.c.h.b16 %v231
        %v328 = vpack.c.b16 %v268, %v264
        %v329 = vpack.c.b16 %v269, %v265
        %v330 = vpack.c.b16 %v270, %v266
        %v331 = vpack.c.b16 %v271, %v267
        %v332 = vpack.c.b16 %v276, %v272
        %v333 = vpack.c.b16 %v277, %v273
        %v334 = vpack.c.b16 %v278, %v274
        %v335 = vpack.c.b16 %v279, %v275
        %v336 = vpack.c.b16 %v284, %v280
        %v337 = vpack.c.b16 %v285, %v281
        %v338 = vpack.c.b16 %v286, %v282
        %v339 = vpack.c.b16 %v287, %v283
        %v340 = vpack.c.b16 %v292, %v288
        %v341 = vpack.c.b16 %v293, %v289
        %v342 = vpack.c.b16 %v294, %v290
        %v343 = vpack.c.b16 %v295, %v291
        %v344 = vpack.c.b16 %v300, %v296
        %v345 = vpack.c.b16 %v301, %v297
        %v346 = vpack.c.b16 %v302, %v298
        %v347 = vpack.c.b16 %v303, %v299
        %v348 = vpack.c.b16 %v308, %v304
        %v349 = vpack.c.b16 %v309, %v305
        %v350 = vpack.c.b16 %v310, %v306
        %v351 = vpack.c.b16 %v311, %v307
        %v352 = vpack.c.b16 %v316, %v312
        %v353 = vpack.c.b16 %v317, %v313
        %v354 = vpack.c.b16 %v318, %v314
        %v355 = vpack.c.b16 %v319, %v315
        %v356 = vpack.c.b16 %v324, %v320
        %v357 = vpack.c.b16 %v325, %v321
        %v358 = vpack.c.b16 %v326, %v322
        %v359 = vpack.c.b16 %v327, %v323
        %392 = vmatprep.subr.bf16.mxu0 %v329
        %393 = vmatpush1.bf16.msra.mxu0 %v328
        %394 = vmatprep.subr.bf16.mxu0 %v333
        %395 = vmatpush1.bf16.msra.mxu0 %v332
        %396 = vmatprep.subr.bf16.mxu0 %v337
        %397 = vmatpush1.bf16.msra.mxu0 %v336
        %398 = vmatprep.subr.bf16.mxu0 %v341
        %399 = vmatpush1.bf16.msra.mxu0 %v340
        %400 = vmatprep.subr.bf16.mxu0 %v345
        %401 = vmatpush1.bf16.msra.mxu0 %v344
        %402 = vmatprep.subr.bf16.mxu0 %v349
        %403 = vmatpush1.bf16.msra.mxu0 %v348
        %404 = vmatprep.subr.bf16.mxu0 %v353
        %405 = vmatpush1.bf16.msra.mxu0 %v352
        %406 = vmatprep.subr.bf16.mxu0 %v357
        %407 = vmatpush1.bf16.msra.mxu0 %v356
        %408 = vmatprep.subr.bf16.mxu0 0
        %409 = vmatpush1.bf16.msra.mxu0 0
        %410 = vmatprep.subr.bf16.mxu0 0
        %411 = vmatpush1.bf16.msra.mxu0 0
        %412 = vmatprep.subr.bf16.mxu0 0
        %413 = vmatpush1.bf16.msra.mxu0 0
        %414 = vmatprep.subr.bf16.mxu0 0
        %415 = vmatpush1.bf16.msra.mxu0 0
        %416 = vmatprep.subr.bf16.mxu0 0
        %417 = vmatpush1.bf16.msra.mxu0 0
        %418 = vmatprep.subr.bf16.mxu0 0
        %419 = vmatpush1.bf16.msra.mxu0 0
        %420 = vmatprep.subr.bf16.mxu0 0
        %421 = vmatpush1.bf16.msra.mxu0 0
        %422 = vmatprep.subr.bf16.mxu0 0
        %423 = vmatpush1.bf16.msra.mxu0 0
        %424 = vmatprep.mubr.bf16.mxu0 0
        %425 = vmatmul.mubr.bf16.gmra.mrb[0].mxu0 %v199
        %v426 = vpop.f32.mrb[0].mxu0
        %v427 = vadd.f32 0.0, %v426
        %v428 = vpop.f32.mrb[0].mxu0
        %v429 = vadd.f32 0.0, %v428
        %v430 = vpop.f32.mrb[0].mxu0
        %v431 = vpop.f32.mrb[0].mxu0
        %432 = vdwg.mxu0
        %433 = vmatprep.subr.bf16.mxu0 %v331
        %434 = vmatpush1.bf16.msra.mxu0 %v330
        %435 = vmatprep.subr.bf16.mxu0 %v335
        %436 = vmatpush1.bf16.msra.mxu0 %v334
        %437 = vmatprep.subr.bf16.mxu0 %v339
        %438 = vmatpush1.bf16.msra.mxu0 %v338
        %439 = vmatprep.subr.bf16.mxu0 %v343
        %440 = vmatpush1.bf16.msra.mxu0 %v342
        %441 = vmatprep.subr.bf16.mxu0 %v347
        %442 = vmatpush1.bf16.msra.mxu0 %v346
        %443 = vmatprep.subr.bf16.mxu0 %v351
        %444 = vmatpush1.bf16.msra.mxu0 %v350
        %445 = vmatprep.subr.bf16.mxu0 %v355
        %446 = vmatpush1.bf16.msra.mxu0 %v354
        %447 = vmatprep.subr.bf16.mxu0 %v359
        %448 = vmatpush1.bf16.msra.mxu0 %v358
        %449 = vmatprep.subr.bf16.mxu0 0
        %450 = vmatpush1.bf16.msra.mxu0 0
        %451 = vmatprep.subr.bf16.mxu0 0
        %452 = vmatpush1.bf16.msra.mxu0 0
        %453 = vmatprep.subr.bf16.mxu0 0
        %454 = vmatpush1.bf16.msra.mxu0 0
        %455 = vmatprep.subr.bf16.mxu0 0
        %456 = vmatpush1.bf16.msra.mxu0 0
        %457 = vmatprep.subr.bf16.mxu0 0
        %458 = vmatpush1.bf16.msra.mxu0 0
        %459 = vmatprep.subr.bf16.mxu0 0
        %460 = vmatpush1.bf16.msra.mxu0 0
        %461 = vmatprep.subr.bf16.mxu0 0
        %462 = vmatpush1.bf16.msra.mxu0 0
        %463 = vmatprep.subr.bf16.mxu0 0
        %464 = vmatpush1.bf16.msra.mxu0 0
        %465 = vmatprep.mubr.bf16.mxu0 0
        %466 = vmatmul.mubr.bf16.gmra.mrb[0].mxu0 %v199
        %v467 = vpop.f32.mrb[0].mxu0
        %v468 = vadd.f32 0.0, %v467
        %v469 = vpop.f32.mrb[0].mxu0
        %v470 = vadd.f32 0.0, %v469
        %v471 = vpop.f32.mrb[0].mxu0
        %v472 = vpop.f32.mrb[0].mxu0
        %473 = vdwg.mxu0
        %v474 = vcvt.f32.s32.to.zero.pseudo %v427
        %v475 = vcvt.f32.s32.to.zero.pseudo %v429
        %v476 = vcvt.f32.s32.to.zero.pseudo %v468
        %v477 = vcvt.f32.s32.to.zero.pseudo %v470
        %v478 = vand.u32 %v474, 1
        %v479 = vand.u32 %v475, 1
        %v480 = vand.u32 %v476, 1
        %v481 = vand.u32 %v477, 1
        %v482 = vcvt.s32.f32 %v478
        %v483 = vcvt.s32.f32 %v479
        %v484 = vcvt.s32.f32 %v480
        %v485 = vcvt.s32.f32 %v481
        %486 = vst [vmem:[%s190] sm:$0xff] %v482
        %487 = vst [vmem:[%s190 + $0x8] sm:$0xff] %v483
        %488 = vst [vmem:[%s190 + $0x10] sm:$0xff] %v484
        %489 = vst [vmem:[%s190 + $0x18] sm:$0xff] %v485
        %s490 = sand.u32 %s91, 1
        %s491 = scalar_lea.sflag [#allocation4], %s490
        %s492 = sand.u32 %s91, 1
        %s493 = smul.addr %s492, 32
        %s494 = scalar_lea.vmem [#allocation7], %s493
        // Predicated region
        $region37: #{tpu_custom_call.1} parent=27 // pred_check
          %p495 = pneg %p101
        $region38: #{tpu_custom_call.1} parent=27 // pred_check_branch
          %497 = sbr.rel (%p495) target = $region40
        $region39: #{tpu_custom_call.1} parent=27 // pred_region
          %s498 = smul.u32 4, %s25
          %s500 = ssub.s32 512, 512
          %501 = vsyncadd %s491, %s500
          %s502 = smul.addr %s24, 4
          %s503 = sadd.s32 %s498, %s502
          %s504 = smul.addr %s503, 128
          %s505 = scalar_lea.hbm %s2, %s504
          %s507 = sshll.u32 %s494, 4
          %s508 = int_to_ptr.vmem [resolvable:$true] %s507
          %510 = dma.vmem_to_hbm [thread:$0]  %s508, 512, %s505, %s491
        $region40: #{tpu_custom_call.1} parent=27 // pred_fallthru
          _
      $region28: #{tpu_custom_call.1} parent=5 // pred_fallthru
        _
      %p511 = scmp.le.s32.totalorder 2, %s15
      // Predicated region
      $region41: #{tpu_custom_call.1} parent=5 // pred_check
        %p512 = pneg %p511
      $region42: #{tpu_custom_call.1} parent=5 // pred_check_branch
        %514 = sbr.rel (%p512) target = $region44
      $region43: #{tpu_custom_call.1} parent=5 // pred_region
        %s515 = ssub.s32 %s15, 2
        // Predicated region
        $region45: #{tpu_custom_call.1} parent=43 // pred_check
          %p516 = pneg %p107
        $region46: #{tpu_custom_call.1} parent=43 // pred_check_branch
          %518 = sbr.rel (%p516) target = $region48
        $region47: #{tpu_custom_call.1} parent=43 // pred_region
          %s519 = sand.u32 %s92, 1
          %s520 = scalar_lea.sflag [#allocation4], %s519
          %s521 = sand.u32 %s92, 1
          %s522 = smul.addr %s521, 32
          %s523 = scalar_lea.vmem [#allocation7], %s522
          %524 = dma.done %s520, 512
        $region48: #{tpu_custom_call.1} parent=43 // pred_fallthru
          _
      $region44: #{tpu_custom_call.1} parent=5 // pred_fallthru
        _
    $region6: #{tpu_custom_call.1} parent=1 // loop_footer
      %s19 = sadd.s32 1, %s15
    $region7: #{tpu_custom_call.1} parent=1 // loop_footer_branch
      %14 = sbr.rel target = $region3
    $region8: #{tpu_custom_call.1} parent=1 // loop_exit
      _
    %525 = vsyncpa [#allocation3], 1
    %s526 = scalar_lea.sflag [#allocation3], 1
    %527 = vsyncpa %s526, 1
    %528 = vsyncpa [#allocation6], 1
    %529 = vsyncpa [#allocation4], 1
    %s530 = scalar_lea.sflag [#allocation4], 1
    %531 = vsyncpa %s530, 1

</llo_original>
